<compile_context>
chip_gen: v7x
topology: tpu7x:2x2x1
jax: 0.10.0
libtpu: 0.0.40
codegen_flags: <defaults>
</compile_context>

<pallas_src>
import jax
import jax.numpy as jnp
import numpy as np
from jax.experimental import pallas as pl
from jax.experimental.pallas import tpu as pltpu

_EPS = 1e-5
_SLOPE = 0.3
F32 = jnp.float32


def _lrelu(v):
    return jnp.where(v > 0, v, _SLOPE * v)


def _fused_conv3(a, pad_ref, w_ref, b_ref):
    """3-tap conv (padding=1) on one batch segment as ONE MXU matmul.

    a:       (L, C) f32 activations of a single sample (time on sublanes).
    pad_ref: (L+2, C) f32 scratch; only the two halo rows are zeroed — the
             interior is fully overwritten (no full zero pass).
    w_ref:   (3*C, Cout) fused weights, row blocks ordered [t-1 | t | t+1].
    Returns  (L, Cout) f32.
    """
    L, C = a.shape
    mm = w_ref.dtype
    zrow = jnp.zeros((1, C), F32)
    pad_ref[pl.ds(0, 1), :] = zrow              # left halo  (t = -1)
    pad_ref[pl.ds(L + 1, 1), :] = zrow          # right halo (t = L)
    pad_ref[pl.ds(1, L), :] = a
    # Three shifted contiguous reads; each slab is cast to the matmul dtype so
    # the (L, 3C) operand is built directly in bf16 (no (L,3C) f32 temp).
    acat = jnp.concatenate(
        [pad_ref[pl.ds(0, L), :].astype(mm),    # a[t-1]
         pad_ref[pl.ds(1, L), :].astype(mm),    # a[t]
         pad_ref[pl.ds(2, L), :].astype(mm)],   # a[t+1]
        axis=1)
    return jnp.dot(acat, w_ref[...], preferred_element_type=F32) + b_ref[...]


def _accum_stats(stat_ref, v):
    """stat_ref (2, C): row 0 += sum(v), row 1 += sum(v*v), reducing rows of v."""
    stat_ref[pl.ds(0, 1), :] += jnp.sum(v, axis=0, keepdims=True)
    stat_ref[pl.ds(1, 1), :] += jnp.sum(v * v, axis=0, keepdims=True)


def _finalize_bn(stat_ref, g_ref, be_ref, count):
    """Turn accumulated [sum; sumsq] into a fused BN (scale, shift), in place."""
    inv_n = 1.0 / jnp.asarray(count, F32)
    mean = stat_ref[pl.ds(0, 1), :] * inv_n
    var = stat_ref[pl.ds(1, 1), :] * inv_n - mean * mean     # biased (training)
    scale = g_ref[...] * jax.lax.rsqrt(var + _EPS)
    shift = be_ref[...] - mean * scale
    stat_ref[pl.ds(0, 1), :] = scale
    stat_ref[pl.ds(1, 1), :] = shift


# ---------------- pass A: bn1 batch statistics ------------------------------
def _bn1_stats_kernel(x_ref, g1_ref, be1_ref, stat_ref):
    b = pl.program_id(0)
    L = x_ref.shape[1]

    @pl.when(b == 0)
    def _():
        stat_ref[...] = jnp.zeros_like(stat_ref)

    _accum_stats(stat_ref, x_ref[0].astype(F32))

    @pl.when(b == pl.num_programs(0) - 1)
    def _():
        _finalize_bn(stat_ref, g1_ref, be1_ref, pl.num_programs(0) * L)


# ---------------- pass B: conv1 + bn2 batch statistics ----------------------
def _conv1_kernel(x_ref, s1_ref, w1_ref, b1_ref, g2_ref, be2_ref,
                  h1_ref, stat_ref, pad_ref):
    b = pl.program_id(0)
    L = x_ref.shape[1]

    x = x_ref[0].astype(F32)                                          # (L, Cin)
    a = _lrelu(x * s1_ref[pl.ds(0, 1), :] + s1_ref[pl.ds(1, 1), :])   # bn1+lrelu
    h = _fused_conv3(a, pad_ref, w1_ref, b1_ref)                      # (L, Cout)
    h1_ref[0] = h.astype(h1_ref.dtype)

    @pl.when(b == 0)
    def _():
        stat_ref[...] = jnp.zeros_like(stat_ref)

    _accum_stats(stat_ref, h)

    @pl.when(b == pl.num_programs(0) - 1)
    def _():
        _finalize_bn(stat_ref, g2_ref, be2_ref, pl.num_programs(0) * L)


# ---------------- pass C: bn2 -> conv2 -> +downsample -> maxpool -> attention
def _tail_kernel(h1_ref, x_ref, s2_ref, w2_ref, b2_ref,
                 wd_ref, bd_ref, wfct_ref, bfc_ref,
                 o_ref, pad_ref):
    L = h1_ref.shape[1]
    Lp = o_ref.shape[1]

    h1 = h1_ref[0].astype(F32)                                        # (L, Cout)
    x = x_ref[0].astype(F32)                                          # (L, Cin)

    a = _lrelu(h1 * s2_ref[pl.ds(0, 1), :] + s2_ref[pl.ds(1, 1), :])  # bn2+lrelu
    h = _fused_conv3(a, pad_ref, w2_ref, b2_ref)                      # (L, Cout)

    # residual 1x1 downsample conv (time folded into matmul rows)
    h = h + jnp.dot(x.astype(wd_ref.dtype), wd_ref[...],
                    preferred_element_type=F32) + bd_ref[...]

    # MaxPool1d(kernel=3, stride=3): reuse the (now dead) pad scratch and take
    # three stride-3 sublane views + two vector maxes.
    pad_ref[pl.ds(0, L), :] = h
    pooled = jnp.maximum(
        jnp.maximum(pad_ref[pl.ds(0, Lp, 3), :], pad_ref[pl.ds(1, Lp, 3), :]),
        pad_ref[pl.ds(2, Lp, 3), :])                                  # (Lp, Cout)

    # attention: per-sample average -> Linear -> Sigmoid (local to this tile)
    tavg = jnp.mean(pooled, axis=0, keepdims=True)                    # (1, Cout)
    att = jax.nn.sigmoid(
        jnp.dot(tavg, wfct_ref[...], preferred_element_type=F32) + bfc_ref[...])
    o_ref[0] = (pooled * att + att).astype(o_ref.dtype)


def _mosaic_params(sem, per_step_bytes):
    # double-buffered per-step tiles + headroom, clamped to [32 MiB, 64 MiB]:
    # above the default scoped limit, within v7x's 64 MiB physical VMEM per TC.
    limit = int(min(max(4 * per_step_bytes + (8 << 20), 32 << 20), 64 << 20))
    return pltpu.CompilerParams(dimension_semantics=sem, vmem_limit_bytes=limit)


def resblock_forward(x, params, *, mm_dtype=jnp.bfloat16):
    """ResBlock forward (first=False, in!=out channels => downsample)."""
    B, Cin, L = x.shape
    Cout = params["w1"].shape[0]
    Lp = L // 3                       # PyTorch MaxPool1d(3) floor-truncates
    assert Lp >= 1, "need at least one pooling window (L >= 3)"
    itm = jnp.dtype(mm_dtype).itemsize

    # time-major activations: (B, L, C), channels on the lane axis
    xt = jnp.transpose(x, (0, 2, 1)).astype(F32)

    row = lambda v: jnp.asarray(v).reshape(1, -1).astype(F32)

    # fused 3-tap conv weights, row blocks ordered [tap t-1 | tap t | tap t+1]
    w1f = jnp.transpose(params["w1"], (2, 1, 0)).reshape(3 * Cin, Cout).astype(mm_dtype)
    w2f = jnp.transpose(params["w2"], (2, 1, 0)).reshape(3 * Cout, Cout).astype(mm_dtype)
    wd = params["wd"][:, :, 0].T.astype(mm_dtype)         # (Cin, Cout)
    wfcT = params["wfc"].T.astype(F32)                     # (Cout, Cout)
    b1, b2 = row(params["b1"]), row(params["b2"])
    bd, bfc = row(params["bd"]), row(params["bfc"])
    g1, be1 = row(params["bn1_g"]), row(params["bn1_b"])
    g2, be2 = row(params["bn2_g"]), row(params["bn2_b"])

    def full(arr):
        nd = arr.ndim
        return pl.BlockSpec(arr.shape, lambda b: (0,) * nd)

    def per_b(l, c):
        return pl.BlockSpec((1, l, c), lambda b: (b, 0, 0))

    # ---- pass A: bn1 statistics (accumulator across the batch grid axis) ----
    s1 = pl.pallas_call(
        _bn1_stats_kernel,
        out_shape=jax.ShapeDtypeStruct((2, Cin), F32),
        grid=(B,),
        in_specs=[per_b(L, Cin), full(g1), full(be1)],
        out_specs=pl.BlockSpec((2, Cin), lambda b: (0, 0)),
        compiler_params=_mosaic_params(("arbitrary",), L * Cin * 4),
    )(xt, g1, be1)

    # ---- pass B: conv1 + bn2 statistics --------------------------------------
    bytes_b = (L * Cin * 4 + L * Cout * 4 + (L + 2) * Cin * 4
               + 3 * Cin * Cout * itm)
    h1, s2 = pl.pallas_call(
        _conv1_kernel,
        out_shape=(jax.ShapeDtypeStruct((B, L, Cout), F32),
                   jax.ShapeDtypeStruct((2, Cout), F32)),
        grid=(B,),
        in_specs=[per_b(L, Cin), full(s1), full(w1f), full(b1),
                  full(g2), full(be2)],
        out_specs=(per_b(L, Cout), pl.BlockSpec((2, Cout), lambda b: (0, 0))),
        scratch_shapes=[pltpu.VMEM((L + 2, Cin), F32)],
        compiler_params=_mosaic_params(("arbitrary",), bytes_b),
    )(xt, s1, w1f, b1, g2, be2)

    # ---- pass C: per-sample tail, megacore-parallel ---------------------------
    bytes_c = (L * Cout * 4 + L * Cin * 4 + Lp * Cout * 4 + (L + 2) * Cout * 4
               + (3 * Cout + Cin) * Cout * itm + Cout * Cout * 4)
    out = pl.pallas_call(
        _tail_kernel,
        out_shape=jax.ShapeDtypeStruct((B, Lp, Cout), x.dtype),
        grid=(B,),
        in_specs=[per_b(L, Cout), per_b(L, Cin), full(s2), full(w2f), full(b2),
                  full(wd), full(bd), full(wfcT), full(bfc)],
        out_specs=per_b(Lp, Cout),
        scratch_shapes=[pltpu.VMEM((L + 2, Cout), F32)],
        compiler_params=_mosaic_params(("parallel",), bytes_c),
    )(h1, xt, s2, w2f, b2, wd, bd, wfcT, bfc)

    # layout plumbing back to PyTorch's (B, Cout, Lp)
    return jnp.transpose(out, (0, 2, 1))


def resblock_ref(x, p):
    """Pure-JAX reference mirroring the PyTorch forward (training-mode BN)."""
    B, Cin, L = x.shape
    y = x

    def bn(v, g, b):
        m = v.mean(axis=(0, 2), keepdims=True)
        var = ((v - m) ** 2).mean(axis=(0, 2), keepdims=True)
        return (v - m) / jnp.sqrt(var + _EPS) * g[None, :, None] + b[None, :, None]

    def lrelu(v):
        return jnp.where(v > 0, v, _SLOPE * v)

    def conv3(v, w, b):
        vp = jnp.pad(v, ((0, 0), (0, 0), (1, 1)))
        out = sum(jnp.einsum("oc,bcl->bol", w[:, :, k], vp[:, :, k:k + L])
                  for k in range(3))
        return out + b[None, :, None]

    h = lrelu(bn(x, p["bn1_g"], p["bn1_b"]))
    h = conv3(h, p["w1"], p["b1"])
    h = lrelu(bn(h, p["bn2_g"], p["bn2_b"]))
    h = conv3(h, p["w2"], p["b2"])
    h = h + jnp.einsum("oc,bcl->bol", p["wd"][:, :, 0], y) + p["bd"][None, :, None]
    Cout = p["w1"].shape[0]
    Lp = L // 3
    pooled = h[:, :, :Lp * 3].reshape(B, Cout, Lp, 3).max(axis=-1)
    tavg = pooled.mean(axis=-1)                                   # (B, Cout)
    att = jax.nn.sigmoid(tavg @ p["wfc"].T + p["bfc"])            # (B, Cout)
    return pooled * att[:, :, None] + att[:, :, None]


if __name__ == "__main__":
    B, Cin, Cout, L = 2, 4, 8, 24     # L divisible by 3 (MaxPool1d(3))
    key = jax.random.PRNGKey(0)
    ks = jax.random.split(key, 14)

    params = {
        "bn1_g": 1.0 + 0.1 * jax.random.normal(ks[0], (Cin,), jnp.float32),
        "bn1_b": 0.1 * jax.random.normal(ks[1], (Cin,), jnp.float32),
        "w1": 0.2 * jax.random.normal(ks[2], (Cout, Cin, 3), jnp.float32),
        "b1": 0.1 * jax.random.normal(ks[3], (Cout,), jnp.float32),
        "bn2_g": 1.0 + 0.1 * jax.random.normal(ks[4], (Cout,), jnp.float32),
        "bn2_b": 0.1 * jax.random.normal(ks[5], (Cout,), jnp.float32),
        "w2": 0.2 * jax.random.normal(ks[6], (Cout, Cout, 3), jnp.float32),
        "b2": 0.1 * jax.random.normal(ks[7], (Cout,), jnp.float32),
        "wd": 0.2 * jax.random.normal(ks[8], (Cout, Cin, 1), jnp.float32),
        "bd": 0.1 * jax.random.normal(ks[9], (Cout,), jnp.float32),
        "wfc": 0.2 * jax.random.normal(ks[10], (Cout, Cout), jnp.float32),
        "bfc": 0.1 * jax.random.normal(ks[11], (Cout,), jnp.float32),
    }
    x = jax.random.normal(ks[12], (B, Cin, L), jnp.float32)

    out = jax.block_until_ready(resblock_forward(x, params))
    ref = jax.block_until_ready(resblock_ref(x, params))

    assert out.shape == (B, Cout, L // 3), out.shape
    np.testing.assert_allclose(np.asarray(out), np.asarray(ref), rtol=2e-2, atol=2e-2)
    print("KERNEL_OK")
</pallas_src>

<mosaic_0001>
module attributes {stable_mosaic.version = 11 : i64} {
  func.func @_bn1_stats_kernel(%arg0: i32, %arg1: memref<1x24x4xf32, #tpu.memory_space<vmem>>, %arg2: memref<1x4xf32, #tpu.memory_space<vmem>>, %arg3: memref<1x4xf32, #tpu.memory_space<vmem>>, %arg4: memref<2x4xf32, #tpu.memory_space<vmem>>) attributes {dimension_semantics = [#tpu.dimension_semantics<arbitrary>], iteration_bounds = array<i64: 2>, scalar_prefetch = 0 : i64, scratch_operands = 0 : i64, tpu.core_type = #tpu.core_type<tc>, window_params = [{transform_indices = @transform_0, window_bounds = array<i64: 1, 24, 4>}, {pipeline_mode = #tpu.pipeline_mode<synchronous>, transform_indices = @transform_1, window_bounds = array<i64: 1, 4>}, {pipeline_mode = #tpu.pipeline_mode<synchronous>, transform_indices = @transform_2, window_bounds = array<i64: 1, 4>}, {pipeline_mode = #tpu.pipeline_mode<synchronous>, transform_indices = @transform_3, window_bounds = array<i64: 2, 4>}]} {
    %c0_i32 = arith.constant 0 : i32
    %0 = arith.cmpi eq, %arg0, %c0_i32 : i32
    %1 = arith.extui %0 : i1 to i32
    %c0_i32_0 = arith.constant 0 : i32
    %2 = arith.cmpi ne, %1, %c0_i32_0 : i32
    scf.if %2 {
      %cst_12 = arith.constant 0.000000e+00 : f32
      %19 = vector.broadcast %cst_12 : f32 to vector<2x4xf32>
      %c0_13 = arith.constant 0 : index
      %c0_14 = arith.constant 0 : index
      %20 = vector.load %arg4[%c0_13, %c0_14] : memref<2x4xf32, #tpu.memory_space<vmem>>, vector<2x4xf32>
      tpu.vector_store %arg4[%c0_13, %c0_14], %19 {strides = array<i32>} : memref<2x4xf32, #tpu.memory_space<vmem>>, vector<2x4xf32>,
    } else {
    }
    %c0 = arith.constant 0 : index
    %c0_1 = arith.constant 0 : index
    %c0_2 = arith.constant 0 : index
    %3 = vector.load %arg1[%c0, %c0_1, %c0_2] : memref<1x24x4xf32, #tpu.memory_space<vmem>>, vector<1x24x4xf32>
    %4 = vector.shape_cast %3 : vector<1x24x4xf32> to vector<24x4xf32>
    %c0_3 = arith.constant 0 : index
    %c0_4 = arith.constant 0 : index
    %5 = vector.load %arg4[%c0_3, %c0_4] : memref<2x4xf32, #tpu.memory_space<vmem>>, vector<1x4xf32>
    %cst = arith.constant dense<0.000000e+00> : vector<4xf32>
    %6 = vector.multi_reduction <add>, %4, %cst [0] : vector<24x4xf32> to vector<4xf32>
    %7 = vector.shape_cast %6 : vector<4xf32> to vector<1x4xf32>
    %8 = arith.addf %5, %7 : vector<1x4xf32>
    %c0_5 = arith.constant 0 : index
    %c0_6 = arith.constant 0 : index
    %9 = vector.load %arg4[%c0_5, %c0_6] : memref<2x4xf32, #tpu.memory_space<vmem>>, vector<1x4xf32>
    tpu.vector_store %arg4[%c0_5, %c0_6], %8 {strides = array<i32>} : memref<2x4xf32, #tpu.memory_space<vmem>>, vector<1x4xf32>,
    %c1 = arith.constant 1 : index
    %c0_7 = arith.constant 0 : index
    %10 = vector.load %arg4[%c1, %c0_7] : memref<2x4xf32, #tpu.memory_space<vmem>>, vector<1x4xf32>
    %11 = arith.mulf %4, %4 : vector<24x4xf32>
    %cst_8 = arith.constant dense<0.000000e+00> : vector<4xf32>
    %12 = vector.multi_reduction <add>, %11, %cst_8 [0] : vector<24x4xf32> to vector<4xf32>
    %13 = vector.shape_cast %12 : vector<4xf32> to vector<1x4xf32>
    %14 = arith.addf %10, %13 : vector<1x4xf32>
    %c1_9 = arith.constant 1 : index
    %c0_10 = arith.constant 0 : index
    %15 = vector.load %arg4[%c1_9, %c0_10] : memref<2x4xf32, #tpu.memory_space<vmem>>, vector<1x4xf32>
    tpu.vector_store %arg4[%c1_9, %c0_10], %14 {strides = array<i32>} : memref<2x4xf32, #tpu.memory_space<vmem>>, vector<1x4xf32>,
    %c1_i32 = arith.constant 1 : i32
    %16 = arith.cmpi eq, %arg0, %c1_i32 : i32
    %17 = arith.extui %16 : i1 to i32
    %c0_i32_11 = arith.constant 0 : i32
    %18 = arith.cmpi ne, %17, %c0_i32_11 : i32
    scf.if %18 {
      %cst_12 = arith.constant 1.000000e+00 : f32
      %cst_13 = arith.constant 4.800000e+01 : f32
      %19 = arith.divf %cst_12, %cst_13 : f32
      %c0_14 = arith.constant 0 : index
      %c0_15 = arith.constant 0 : index
      %20 = vector.load %arg4[%c0_14, %c0_15] : memref<2x4xf32, #tpu.memory_space<vmem>>, vector<1x4xf32>
      %21 = vector.broadcast %19 : f32 to vector<1x4xf32>
      %22 = arith.mulf %20, %21 : vector<1x4xf32>
      %c1_16 = arith.constant 1 : index
      %c0_17 = arith.constant 0 : index
      %23 = vector.load %arg4[%c1_16, %c0_17] : memref<2x4xf32, #tpu.memory_space<vmem>>, vector<1x4xf32>
      %24 = vector.broadcast %19 : f32 to vector<1x4xf32>
      %25 = arith.mulf %23, %24 : vector<1x4xf32>
      %26 = arith.mulf %22, %22 : vector<1x4xf32>
      %27 = arith.subf %25, %26 : vector<1x4xf32>
      %c0_18 = arith.constant 0 : index
      %c0_19 = arith.constant 0 : index
      %28 = vector.load %arg2[%c0_18, %c0_19] : memref<1x4xf32, #tpu.memory_space<vmem>>, vector<1x4xf32>
      %cst_20 = arith.constant 9.99999974E-6 : f32
      %29 = vector.broadcast %cst_20 : f32 to vector<1x4xf32>
      %30 = arith.addf %27, %29 : vector<1x4xf32>
      %31 = math.rsqrt %30 : vector<1x4xf32>
      %32 = arith.mulf %28, %31 : vector<1x4xf32>
      %c0_21 = arith.constant 0 : index
      %c0_22 = arith.constant 0 : index
      %33 = vector.load %arg3[%c0_21, %c0_22] : memref<1x4xf32, #tpu.memory_space<vmem>>, vector<1x4xf32>
      %34 = arith.mulf %22, %32 : vector<1x4xf32>
      %35 = arith.subf %33, %34 : vector<1x4xf32>
      %c0_23 = arith.constant 0 : index
      %c0_24 = arith.constant 0 : index
      %36 = vector.load %arg4[%c0_23, %c0_24] : memref<2x4xf32, #tpu.memory_space<vmem>>, vector<1x4xf32>
      tpu.vector_store %arg4[%c0_23, %c0_24], %32 {strides = array<i32>} : memref<2x4xf32, #tpu.memory_space<vmem>>, vector<1x4xf32>,
      %c1_25 = arith.constant 1 : index
      %c0_26 = arith.constant 0 : index
      %37 = vector.load %arg4[%c1_25, %c0_26] : memref<2x4xf32, #tpu.memory_space<vmem>>, vector<1x4xf32>
      tpu.vector_store %arg4[%c1_25, %c0_26], %35 {strides = array<i32>} : memref<2x4xf32, #tpu.memory_space<vmem>>, vector<1x4xf32>,
    } else {
    }
    return
  }
  func.func @transform_0(%arg0: i32) -> (i32, i32, i32) {
    %c0_i32 = arith.constant 0 : i32
    %c0_i32_0 = arith.constant 0 : i32
    %c0_i32_1 = arith.constant 0 : i32
    return %arg0, %c0_i32, %c0_i32_0 : i32, i32, i32
  }
  func.func @transform_1(%arg0: i32) -> (i32, i32) {
    %c0_i32 = arith.constant 0 : i32
    %c0_i32_0 = arith.constant 0 : i32
    %c0_i32_1 = arith.constant 0 : i32
    return %c0_i32, %c0_i32_0 : i32, i32
  }
  func.func @transform_2(%arg0: i32) -> (i32, i32) {
    %c0_i32 = arith.constant 0 : i32
    %c0_i32_0 = arith.constant 0 : i32
    %c0_i32_1 = arith.constant 0 : i32
    return %c0_i32, %c0_i32_0 : i32, i32
  }
  func.func @transform_3(%arg0: i32) -> (i32, i32) {
    %c0_i32 = arith.constant 0 : i32
    %c0_i32_0 = arith.constant 0 : i32
    %c0_i32_1 = arith.constant 0 : i32
    return %c0_i32, %c0_i32_0 : i32, i32
  }
}

</mosaic_0001>

<llo_original>
// kernel: tpu_custom_call.1
$region0: #{tpu_custom_call.1}
  #allocation0 [shape = 'u32[]', space=smem, size = 0x4, offset = 0x4, fixed_abs, tag = 'smem constant byte address 0x4 - core index']
  #allocation1 [shape = 'u32[144,128]{1,0:T(1,128)}', space=vmem, size = 0x12000, scoped, tag = 'internal scratch']
  %s0 = inlined_call_operand.vmem [shape: f32[2,24,4], index: 0, kind: input, shape index: {}]
  %s1 = inlined_call_operand.vmem [shape: f32[1,4], index: 1, kind: input, shape index: {}]
  %s2 = inlined_call_operand.vmem [shape: f32[1,4], index: 2, kind: input, shape index: {}]
  %s3 = inlined_call_operand.hbm [shape: f32[2,4], index: 3, kind: output, shape index: {}]
  %s4 = sld [smem:[#allocation0]]
  $region53: #{tpu_custom_call.1} parent=0
    _
  %s6 = ssub.s32 1, %s4
  %s7 = scalar_select 0, %s6, %s4
  $region1: #{tpu_custom_call.1} parent=0
    #allocation2 [shape = 'u8[1024]{0}', space=vmem, size = 0x400, scoped, tag = 'output window, operand 0, single buffered']
    #allocation3 [shape = 's32[2]{0}', space=sflag, size = 0x8, scoped, tag = 'scoped memory for tpu_custom_call.1']
    %8 = vsyncpa [#allocation3], 0
    loop: start=0, step=1, limit=4
    $region2: #{tpu_custom_call.1} parent=1 // loop_pre_header
      _
    $region3: #{tpu_custom_call.1} parent=1 // loop_header
      %s10 = sphi 0, %s14
      %p11 = scmp.ge.s32.totalorder %s10, 4
      %s20 = sphi 0, %s22
      %s23 = sphi 0, %s20
      %s24 = sphi 0, %s23
      %s40 = sphi 0, %s24
      %s44 = sphi 0, %s44
      %s46 = sphi 0, %s44
      %s47 = sphi 0, %s46
      %s61 = sphi 0, %s47
      %s65 = sphi 0, %s65
      %s67 = sphi 0, %s65
      %s68 = sphi 0, %s67
      %s82 = sphi 0, %s68
      %s86 = sphi 0, %s86
      %s88 = sphi 0, %s86
      %s89 = sphi 0, %s88
      %s103 = sphi 0, %s89
    $region4: #{tpu_custom_call.1} parent=1 // loop_header_branch
      %13 = sbr.rel (%p11) target = $region8
    $region5: #{tpu_custom_call.1} parent=1 // loop_body
      %s15 = ssub.s32 %s10, 1
      %s16 = ssub.s32 %s10, 2
      %s17 = sadd.s32 %s10, 1
      %s18 = ssub.s32 %s10, %s17
      %p19 = scmp.eq.s32.totalorder %s18, 0
      %s21 = sadd.s32 %s20, 1
      %s22 = scalar_select %p19, %s20, %s21
      %p25 = pneg %p19
      %p26 = scmp.eq.s32.totalorder %s10, 1
      %p27 = por %p25, %p26
      %p28 = scmp.ne.s32.totalorder %s20, %s23
      %p29 = scmp.eq.s32.totalorder %s10, 0
      %p30 = por %p28, %p29
      %p31 = scmp.ne.s32.totalorder %s20, %s23
      %p32 = scmp.eq.s32.totalorder %s15, 1
      %p33 = por %p31, %p32
      %p34 = scmp.ne.s32.totalorder %s23, %s24
      %p35 = scmp.eq.s32.totalorder %s15, 0
      %p36 = por %p34, %p35
      %p37 = scmp.ne.s32.totalorder %s23, %s24
      %p38 = scmp.eq.s32.totalorder %s16, 1
      %p39 = por %p37, %p38
      %p41 = scmp.ne.s32.totalorder %s24, %s40
      %p42 = scmp.eq.s32.totalorder %s16, 0
      %p43 = por %p41, %p42
      %s45 = sadd.s32 %s44, 1
      %p48 = scmp.eq.s32.totalorder %s10, 1
      %p49 = scmp.ne.s32.totalorder %s44, %s46
      %p50 = scmp.eq.s32.totalorder %s10, 0
      %p51 = por %p49, %p50
      %p52 = scmp.ne.s32.totalorder %s44, %s46
      %p53 = scmp.eq.s32.totalorder %s15, 1
      %p54 = por %p52, %p53
      %p55 = scmp.ne.s32.totalorder %s46, %s47
      %p56 = scmp.eq.s32.totalorder %s15, 0
      %p57 = por %p55, %p56
      %p58 = scmp.ne.s32.totalorder %s46, %s47
      %p59 = scmp.eq.s32.totalorder %s16, 1
      %p60 = por %p58, %p59
      %p62 = scmp.ne.s32.totalorder %s47, %s61
      %p63 = scmp.eq.s32.totalorder %s16, 0
      %p64 = por %p62, %p63
      %s66 = sadd.s32 %s65, 1
      %p69 = scmp.eq.s32.totalorder %s10, 1
      %p70 = scmp.ne.s32.totalorder %s65, %s67
      %p71 = scmp.eq.s32.totalorder %s10, 0
      %p72 = por %p70, %p71
      %p73 = scmp.ne.s32.totalorder %s65, %s67
      %p74 = scmp.eq.s32.totalorder %s15, 1
      %p75 = por %p73, %p74
      %p76 = scmp.ne.s32.totalorder %s67, %s68
      %p77 = scmp.eq.s32.totalorder %s15, 0
      %p78 = por %p76, %p77
      %p79 = scmp.ne.s32.totalorder %s67, %s68
      %p80 = scmp.eq.s32.totalorder %s16, 1
      %p81 = por %p79, %p80
      %p83 = scmp.ne.s32.totalorder %s68, %s82
      %p84 = scmp.eq.s32.totalorder %s16, 0
      %p85 = por %p83, %p84
      %s87 = sadd.s32 %s86, 1
      %p90 = scmp.eq.s32.totalorder %s10, 1
      %p91 = scmp.ne.s32.totalorder %s86, %s88
      %p92 = scmp.eq.s32.totalorder %s10, 0
      %p93 = por %p91, %p92
      %p94 = scmp.ne.s32.totalorder %s86, %s88
      %p95 = scmp.eq.s32.totalorder %s15, 1
      %p96 = por %p94, %p95
      %p97 = scmp.ne.s32.totalorder %s88, %s89
      %p98 = scmp.eq.s32.totalorder %s15, 0
      %p99 = por %p97, %p98
      %p100 = scmp.ne.s32.totalorder %s88, %s89
      %p101 = scmp.eq.s32.totalorder %s16, 1
      %p102 = por %p100, %p101
      %p104 = scmp.ne.s32.totalorder %s89, %s103
      %p105 = scmp.eq.s32.totalorder %s16, 0
      %p106 = por %p104, %p105
      %p107 = scmp.le.s32.totalorder 1, %s10
      %p108 = scmp.lt.s32.totalorder %s10, 3
      %p109 = pnand %p107, %p108
      %p110 = pneg %p109
      // Predicated region
      $region9: #{tpu_custom_call.1} parent=5 // pred_check
        _
      $region10: #{tpu_custom_call.1} parent=5 // pred_check_branch
        %112 = sbr.rel (%p109) target = $region12
      $region11: #{tpu_custom_call.1} parent=5 // pred_region
        %s113 = ssub.s32 %s10, 1
        // Predicated region
        $region13: #{tpu_custom_call.1} parent=11 // pred_check
          %p114 = pneg %p57
        $region14: #{tpu_custom_call.1} parent=11 // pred_check_branch
          %116 = sbr.rel (%p114) target = $region16
        $region15: #{tpu_custom_call.1} parent=11 // pred_region
          _
        $region16: #{tpu_custom_call.1} parent=11 // pred_fallthru
          _
        // Predicated region
        $region17: #{tpu_custom_call.1} parent=11 // pred_check
          %p117 = pneg %p78
        $region18: #{tpu_custom_call.1} parent=11 // pred_check_branch
          %119 = sbr.rel (%p117) target = $region20
        $region19: #{tpu_custom_call.1} parent=11 // pred_region
          _
        $region20: #{tpu_custom_call.1} parent=11 // pred_fallthru
          _
      $region12: #{tpu_custom_call.1} parent=5 // pred_fallthru
        _
      %p120 = scmp.lt.s32.totalorder %s10, 2
      // Predicated region
      $region21: #{tpu_custom_call.1} parent=5 // pred_check
        %p121 = pneg %p120
      $region22: #{tpu_custom_call.1} parent=5 // pred_check_branch
        %123 = sbr.rel (%p121) target = $region24
      $region23: #{tpu_custom_call.1} parent=5 // pred_region
        // Predicated region
        $region25: #{tpu_custom_call.1} parent=23 // pred_check
          %p124 = pneg %p30
        $region26: #{tpu_custom_call.1} parent=23 // pred_check_branch
          %126 = sbr.rel (%p124) target = $region28
        $region27: #{tpu_custom_call.1} parent=23 // pred_region
          %p127 = scmp.lt.s32.totalorder %s10, 1
          %s128 = scalar_select %p127, %s10, 1
          %s129 = smul.addr %s128, 3
          %s130 = smul.addr %s129, 8
          %s131 = scalar_lea.vmem %s0, %s130
        $region28: #{tpu_custom_call.1} parent=23 // pred_fallthru
          _
      $region24: #{tpu_custom_call.1} parent=5 // pred_fallthru
        _
      %p132 = scmp.le.s32.totalorder 1, %s10
      %p133 = scmp.lt.s32.totalorder %s10, 3
      %p134 = pnand %p132, %p133
      %p135 = pneg %p134
      // Predicated region
      $region29: #{tpu_custom_call.1} parent=5 // pred_check
        _
      $region30: #{tpu_custom_call.1} parent=5 // pred_check_branch
        %137 = sbr.rel (%p134) target = $region32
      $region31: #{tpu_custom_call.1} parent=5 // pred_region
        %s138 = ssub.s32 %s10, 1
        %p139 = scmp.lt.s32.totalorder %s15, 1
        %s140 = scalar_select %p139, %s15, 1
        %s141 = smul.addr %s140, 3
        %s142 = smul.addr %s141, 8
        %s143 = scalar_lea.vmem %s0, %s142
        %p144 = pneg %p36
        %p145 = pneg %p33
        %p146 = pneg %p57
        %p147 = pneg %p54
        %p148 = pneg %p78
        %p149 = pneg %p75
        %p150 = pneg %p99
        %p151 = pneg %p96
        %p152 = scmp.lt.s32.totalorder %s15, 1
        %s153 = scalar_select %p152, %s15, 1
        %s154 = smul.addr %s153, 3
        %s155 = smul.addr %s154, 8
        %s156 = scalar_lea.vmem %s0, %s155
        %p157 = scmp.eq.s32.totalorder %s15, 0
        // Predicated region
        $region33: #{tpu_custom_call.1} parent=31 // pred_check
          %p158 = pneg %p157
        $region34: #{tpu_custom_call.1} parent=31 // pred_check_branch
          %160 = sbr.rel (%p158) target = $region36
        $region35: #{tpu_custom_call.1} parent=31 // pred_region
          %vm161 = vcmask 25600
          %162 = vst.msk [vmem:[#allocation2] sm:$0x3] %vm161, 0.0
        $region36: #{tpu_custom_call.1} parent=31 // pred_fallthru
          _
        %v163 = vld [vmem:[%s156] sm:$0xff]
        %v164 = vld [vmem:[%s156 + $0x8] sm:$0xff]
        %v165 = vld [vmem:[%s156 + $0x10] sm:$0xff]
        %v166 = vld [vmem:[#allocation2] sm:$0x1]
        %vm167 = vcmask 31744
        %v168 = vsel %vm167, %v163, 0.0
        %v169 = vsel %vm167, %v164, 0.0
        %v170 = vadd.f32 %v168, %v169
        %v171 = vsel %vm167, %v165, 0.0
        %v172 = vadd.f32 %v170, %v171
        %v173 = vrot.slane %v172, 4
        %v174 = vadd.f32 %v172, %v173
        %v175 = vrot.slane %v174, 2
        %v176 = vadd.f32 %v174, %v175
        %v177 = vrot.slane %v176, 1
        %v178 = vadd.f32 %v176, %v177
        %v179 = vadd.f32 %v166, %v178
        %vm180 = vcmask 24576
        %181 = vst.msk [vmem:[#allocation2] sm:$0x1] %vm180, %v179
        %v182 = vld [vmem:[#allocation2 + $0x1] sm:$0x1]
        %v183 = vmul.f32 %v163, %v163
        %v184 = vmul.f32 %v164, %v164
        %v185 = vmul.f32 %v165, %v165
        %v186 = vsel %vm167, %v183, 0.0
        %v187 = vsel %vm167, %v184, 0.0
        %v188 = vadd.f32 %v186, %v187
        %v189 = vsel %vm167, %v185, 0.0
        %v190 = vadd.f32 %v188, %v189
        %v191 = vrot.slane %v190, 4
        %v192 = vadd.f32 %v190, %v191
        %v193 = vrot.slane %v192, 2
        %v194 = vadd.f32 %v192, %v193
        %v195 = vrot.slane %v194, 1
        %v196 = vadd.f32 %v194, %v195
        %v197 = vadd.f32 %v182, %v196
        %198 = vst.msk [vmem:[#allocation2 + $0x1] sm:$0x1] %vm180, %v197
        %p199 = scmp.eq.s32.totalorder %s15, 1
        // Predicated region
        $region37: #{tpu_custom_call.1} parent=31 // pred_check
          %p200 = pneg %p199
        $region38: #{tpu_custom_call.1} parent=31 // pred_check_branch
          %202 = sbr.rel (%p200) target = $region40
        $region39: #{tpu_custom_call.1} parent=31 // pred_region
          %v203 = vld [vmem:[#allocation2] sm:$0x1]
          %v204 = vmul.f32 %v203, 0.020833334
          %v205 = vld [vmem:[#allocation2 + $0x1] sm:$0x1]
          %v206 = vmul.f32 %v205, 0.020833334
          %v207 = vmul.f32 %v204, %v204
          %v208 = vsub.f32 %v206, %v207
          %v209 = vld [vmem:[%s1] sm:$0x1]
          %v210 = vadd.f32 %v208, 1e-05
          %v211 = vrsqrt.pop %v210
          %v212 = vmul.f32 %v209, %v211
          %v213 = vld [vmem:[%s2] sm:$0x1]
          %v214 = vmul.f32 %v204, %v212
          %v215 = vsub.f32 %v213, %v214
          %216 = vst.msk [vmem:[#allocation2] sm:$0x1] %vm180, %v212
          %217 = vst.msk [vmem:[#allocation2 + $0x1] sm:$0x1] %vm180, %v215
        $region40: #{tpu_custom_call.1} parent=31 // pred_fallthru
          _
        // Predicated region
        $region41: #{tpu_custom_call.1} parent=31 // pred_check
          %p218 = pneg %p96
        $region42: #{tpu_custom_call.1} parent=31 // pred_check_branch
          %220 = sbr.rel (%p218) target = $region44
        $region43: #{tpu_custom_call.1} parent=31 // pred_region
          %s222 = ssub.s32 32, 32
          %223 = vsyncadd [#allocation3], %s222
          %s225 = sshll.u32 [#allocation2], 4
          %s226 = int_to_ptr.vmem [resolvable:$true] %s225
          %228 = dma.vmem_to_hbm [thread:$0]  %s226, 32, %s3, [#allocation3]
        $region44: #{tpu_custom_call.1} parent=31 // pred_fallthru
          _
        // Predicated region
        $region45: #{tpu_custom_call.1} parent=31 // pred_check
          %p229 = pneg %p96
        $region46: #{tpu_custom_call.1} parent=31 // pred_check_branch
          %231 = sbr.rel (%p229) target = $region48
        $region47: #{tpu_custom_call.1} parent=31 // pred_region
          %232 = dma.done [#allocation3], 32
        $region48: #{tpu_custom_call.1} parent=31 // pred_fallthru
          _
      $region32: #{tpu_custom_call.1} parent=5 // pred_fallthru
        _
      %p233 = scmp.le.s32.totalorder 2, %s10
      // Predicated region
      $region49: #{tpu_custom_call.1} parent=5 // pred_check
        %p234 = pneg %p233
      $region50: #{tpu_custom_call.1} parent=5 // pred_check_branch
        %236 = sbr.rel (%p234) target = $region52
      $region51: #{tpu_custom_call.1} parent=5 // pred_region
        %s237 = ssub.s32 %s10, 2
      $region52: #{tpu_custom_call.1} parent=5 // pred_fallthru
        _
    $region6: #{tpu_custom_call.1} parent=1 // loop_footer
      %s14 = sadd.s32 1, %s10
    $region7: #{tpu_custom_call.1} parent=1 // loop_footer_branch
      %9 = sbr.rel target = $region3
    $region8: #{tpu_custom_call.1} parent=1 // loop_exit
      _
    %238 = vsyncpa [#allocation3], 1
    %s239 = scalar_lea.sflag [#allocation3], 1
    %240 = vsyncpa %s239, 1

</llo_original>
